<compile_context>
chip_gen: v7x
topology: tpu7x:2x2x1
jax: 0.10.0
libtpu: 0.0.40
codegen_flags: <defaults>
</compile_context>

<pallas_src>
import functools

import jax
import jax.numpy as jnp
from jax.experimental import pallas as pl
from jax.experimental.pallas import tpu as pltpu

_VMEM_LIMIT = 48 * 1024 * 1024  # explicit budget; tiles sized well under v7x's 64 MiB


def _pick_tile(n, target=256):
    """Token-tile size: multiple of 8, <= target, and >=2 grid steps when possible."""
    if n <= 8:
        return n
    t = min(target, n)
    t = (t // 8) * 8
    if t == n:  # force at least 2 grid steps (pipelining / v7x megacore)
        t = max(8, ((n // 2) // 8) * 8)
    return t


# ----------------------------------------------------------------------------
# Fused per-scale kernel: q-proj + kv-proj + attention + (Linear, LN, ReLU)
# ----------------------------------------------------------------------------
def _fused_scale_kernel(x_ref, y_ref, wq_ref, wk_ref, wv_ref, wm_ref,
                        bm_ref, g_ref, beta_ref, o_ref, k_s, v_s,
                        *, num_heads, head_dim, scale):
    qt = pl.program_id(1)

    # k/v projection once per batch, cached in VMEM scratch across query tiles.
    @pl.when(qt == 0)
    def _():
        y = y_ref[0]                                                    # [Ni, c] bf16
        k = jnp.dot(y, wk_ref[...], preferred_element_type=jnp.float32)
        v = jnp.dot(y, wv_ref[...], preferred_element_type=jnp.float32)
        k_s[...] = k.astype(k_s.dtype)
        v_s[...] = v.astype(v_s.dtype)

    x = x_ref[0]                                                        # [TQ, C] bf16
    q = jnp.dot(x, wq_ref[...], preferred_element_type=jnp.float32) * scale
    q = q.astype(jnp.bfloat16)                                          # [TQ, c]

    tq = x.shape[0]
    c = num_heads * head_dim
    acc = jnp.zeros((tq, c), jnp.float32)
    for h in range(num_heads):
        lo, hi = h * head_dim, (h + 1) * head_dim
        q_h = q[:, lo:hi]                                               # [TQ, hd] bf16
        k_h = k_s[:, lo:hi]                                             # [Ni, hd] bf16
        v_h = v_s[:, lo:hi]                                             # [Ni, hd] bf16
        # scores: contract last axes directly (no k transpose / relayout).
        s = jax.lax.dot_general(q_h, k_h, (((1,), (1,)), ((), ())),
                                preferred_element_type=jnp.float32)     # [TQ, Ni]
        s = s - jnp.max(s, axis=-1, keepdims=True)
        p = jnp.exp(s)
        p = p * pl.reciprocal(jnp.sum(p, axis=-1, keepdims=True), approx=True)
        o_h = jnp.dot(p.astype(jnp.bfloat16), v_h,
                      preferred_element_type=jnp.float32)               # [TQ, hd]
        # Fold the per-head output straight into the mlp linear:
        #   concat_h(o_h) @ Wm == sum_h o_h @ Wm[h*hd:(h+1)*hd, :]
        acc = acc + jnp.dot(o_h.astype(jnp.bfloat16), wm_ref[lo:hi, :],
                            preferred_element_type=jnp.float32)

    hlin = acc + bm_ref[...]                                            # [TQ, c] f32
    mean = jnp.mean(hlin, axis=-1, keepdims=True)
    var = jnp.mean((hlin - mean) ** 2, axis=-1, keepdims=True)
    hn = (hlin - mean) * jax.lax.rsqrt(var + 1e-5) * g_ref[...] + beta_ref[...]
    o_ref[0] = jnp.maximum(hn, 0.0).astype(o_ref.dtype)


def fused_scale_attention(x_bf, y_bf, wq, wk, wv, wm, bm, gamma, beta,
                          *, num_heads, head_dim, scale):
    B, N, C = x_bf.shape
    _, Ni, c = y_bf.shape
    tq = _pick_tile(N)
    n_qt = pl.cdiv(N, tq)

    kernel = functools.partial(_fused_scale_kernel, num_heads=num_heads,
                               head_dim=head_dim, scale=scale)

    flops = 2 * B * (N * C * c + Ni * c * 2 * c + 2 * N * Ni * c + N * c * c)
    bytes_accessed = (2 * (x_bf.size + y_bf.size + B * N * c)
                      + 2 * (wq.size + wk.size + wv.size + wm.size)
                      + 4 * (bm.size + gamma.size + beta.size))
    cost = pl.CostEstimate(flops=flops, transcendentals=B * num_heads * N * Ni,
                           bytes_accessed=bytes_accessed)

    return pl.pallas_call(
        kernel,
        out_shape=jax.ShapeDtypeStruct((B, N, c), jnp.bfloat16),
        grid=(B, n_qt),
        in_specs=[
            pl.BlockSpec((1, tq, C), lambda b, t: (b, t, 0)),   # x tokens (query tile)
            pl.BlockSpec((1, Ni, c), lambda b, t: (b, 0, 0)),   # y tokens (whole level)
            pl.BlockSpec((C, c), lambda b, t: (0, 0)),          # W_q column slice
            pl.BlockSpec((c, c), lambda b, t: (0, 0)),          # W_k (de-interleaved)
            pl.BlockSpec((c, c), lambda b, t: (0, 0)),          # W_v (de-interleaved)
            pl.BlockSpec((c, c), lambda b, t: (0, 0)),          # W_mlp
            pl.BlockSpec((1, c), lambda b, t: (0, 0)),          # b_mlp
            pl.BlockSpec((1, c), lambda b, t: (0, 0)),          # LN gamma
            pl.BlockSpec((1, c), lambda b, t: (0, 0)),          # LN beta
        ],
        out_specs=pl.BlockSpec((1, tq, c), lambda b, t: (b, t, 0)),
        scratch_shapes=[pltpu.VMEM((Ni, c), jnp.bfloat16),      # cached k
                        pltpu.VMEM((Ni, c), jnp.bfloat16)],     # cached v
        compiler_params=pltpu.CompilerParams(
            dimension_semantics=("parallel", "arbitrary"),
            vmem_limit_bytes=_VMEM_LIMIT),
        cost_estimate=cost,
    )(x_bf, y_bf, wq, wk, wv, wm, bm, gamma, beta)


# ----------------------------------------------------------------------------
# Output projection + bias + residual, tiled over tokens.
# The channel concat is replaced by summing per-scale partial matmuls.
# ----------------------------------------------------------------------------
def _proj_residual_kernel(*refs, num_scales):
    o_refs = refs[:num_scales]
    w_refs = refs[num_scales:2 * num_scales]
    b_ref = refs[2 * num_scales]
    x_ref = refs[2 * num_scales + 1]
    out_ref = refs[2 * num_scales + 2]

    acc = x_ref[...] + b_ref[...]                                   # f32 residual + bias
    for s in range(num_scales):
        acc = acc + jnp.dot(o_refs[s][...], w_refs[s][...],
                            preferred_element_type=jnp.float32)
    out_ref[...] = acc.astype(out_ref.dtype)


def proj_residual(outs, w_proj, b_proj, x_res, kv_channels):
    M, C = x_res.shape
    S = len(outs)
    tm = _pick_tile(M)

    w_slices = []
    off = 0
    for c_i in kv_channels:
        w_slices.append(w_proj[off:off + c_i, :].astype(jnp.bfloat16))
        off += c_i
    b2 = b_proj.reshape(1, C).astype(jnp.float32)

    in_specs = (
        [pl.BlockSpec((tm, o.shape[1]), lambda m: (m, 0)) for o in outs]
        + [pl.BlockSpec(w.shape, lambda m: (0, 0)) for w in w_slices]
        + [pl.BlockSpec((1, C), lambda m: (0, 0)),
           pl.BlockSpec((tm, C), lambda m: (m, 0))]
    )

    flops = 2 * M * C * C
    bytes_accessed = (2 * sum(int(o.size) for o in outs)
                      + 2 * sum(int(w.size) for w in w_slices)
                      + 4 * (2 * M * C + C))
    cost = pl.CostEstimate(flops=flops, transcendentals=0,
                           bytes_accessed=bytes_accessed)

    return pl.pallas_call(
        functools.partial(_proj_residual_kernel, num_scales=S),
        out_shape=jax.ShapeDtypeStruct((M, C), x_res.dtype),
        grid=(pl.cdiv(M, tm),),
        in_specs=in_specs,
        out_specs=pl.BlockSpec((tm, C), lambda m: (m, 0)),
        compiler_params=pltpu.CompilerParams(
            dimension_semantics=("parallel",),
            vmem_limit_bytes=_VMEM_LIMIT),
        cost_estimate=cost,
    )(*outs, *w_slices, b2, x_res)


# ----------------------------------------------------------------------------
# Module forward
# ----------------------------------------------------------------------------
def cascaded_pyramid_attention(x, y_list, params, *, num_heads, kv_channels):
    B, C, N = x.shape
    hd = C // num_heads
    scale = float(hd) ** -0.5
    bf = jnp.bfloat16

    x_bnc = jnp.transpose(x, (0, 2, 1))           # [B, N, C] f32 (residual path)
    x_bf = x_bnc.astype(bf)                       # bf16 activations for the MXU

    outs = []
    off = 0
    for i, c_i in enumerate(kv_channels):
        p = params["scales"][i]
        h_i = c_i // hd
        y_bf = jnp.transpose(y_list[i], (0, 2, 1)).astype(bf)      # [B, Ni, c_i]
        # q column slice for this scale's heads (== heads [off/hd : off/hd + h_i]).
        wq_i = params["w_q"][:, off:off + c_i].astype(bf)
        # De-interleave kv projection columns: torch layout is (head, hd, {k,v}),
        # so k = even columns, v = odd columns, already in (head, hd) order.
        wk_i = p["w_kv"][:, 0::2].astype(bf)
        wv_i = p["w_kv"][:, 1::2].astype(bf)
        wm_i = p["w_mlp"].astype(bf)
        bm_i = p["b_mlp"].reshape(1, c_i).astype(jnp.float32)
        g_i = p["gamma"].reshape(1, c_i).astype(jnp.float32)
        be_i = p["beta"].reshape(1, c_i).astype(jnp.float32)

        o_i = fused_scale_attention(x_bf, y_bf, wq_i, wk_i, wv_i, wm_i,
                                    bm_i, g_i, be_i,
                                    num_heads=h_i, head_dim=hd, scale=scale)
        outs.append(o_i.reshape(B * N, c_i))
        off += c_i

    out = proj_residual(outs, params["w_proj"], params["b_proj"],
                        x_bnc.reshape(B * N, C), kv_channels)
    return jnp.transpose(out.reshape(B, N, C), (0, 2, 1))           # [B, C, N]


# ----------------------------------------------------------------------------
# Pure-JAX reference (same math & same bf16 casts, no Pallas)
# ----------------------------------------------------------------------------
def reference(x, y_list, params, *, num_heads, kv_channels):
    B, C, N = x.shape
    hd = C // num_heads
    scale = float(hd) ** -0.5
    bf = jnp.bfloat16
    f32 = jnp.float32

    x_bnc = jnp.transpose(x, (0, 2, 1))
    x_bf = x_bnc.astype(bf)
    outs = []
    off = 0
    for i, c_i in enumerate(kv_channels):
        p = params["scales"][i]
        h_i = c_i // hd
        y_bf = jnp.transpose(y_list[i], (0, 2, 1)).astype(bf)
        wq_i = params["w_q"][:, off:off + c_i].astype(bf)
        wk_i = p["w_kv"][:, 0::2].astype(bf)
        wv_i = p["w_kv"][:, 1::2].astype(bf)
        wm_i = p["w_mlp"].astype(bf)

        q = (jnp.einsum("bnc,cd->bnd", x_bf, wq_i, preferred_element_type=f32)
             * scale).astype(bf)
        k = jnp.einsum("bnc,cd->bnd", y_bf, wk_i, preferred_element_type=f32).astype(bf)
        v = jnp.einsum("bnc,cd->bnd", y_bf, wv_i, preferred_element_type=f32).astype(bf)

        qh = q.reshape(B, N, h_i, hd)
        kh = k.reshape(B, -1, h_i, hd)
        vh = v.reshape(B, -1, h_i, hd)
        s = jnp.einsum("bqhd,bkhd->bhqk", qh, kh, preferred_element_type=f32)
        attn = jax.nn.softmax(s, axis=-1)
        o = jnp.einsum("bhqk,bkhd->bqhd", attn.astype(bf), vh,
                       preferred_element_type=f32).reshape(B, N, c_i)

        hlin = jnp.einsum("bnc,cd->bnd", o.astype(bf), wm_i,
                          preferred_element_type=f32) + p["b_mlp"]
        mean = jnp.mean(hlin, -1, keepdims=True)
        var = jnp.mean((hlin - mean) ** 2, -1, keepdims=True)
        hn = (hlin - mean) * jax.lax.rsqrt(var + 1e-5) * p["gamma"] + p["beta"]
        outs.append(jnp.maximum(hn, 0.0).astype(bf))
        off += c_i

    outs_cat = jnp.concatenate(outs, axis=-1)
    out = (jnp.einsum("bnc,cd->bnd", outs_cat, params["w_proj"].astype(bf),
                      preferred_element_type=f32)
           + params["b_proj"] + x_bnc)
    return jnp.transpose(out, (0, 2, 1))


# ----------------------------------------------------------------------------
# Deterministic parameter init + driver
# ----------------------------------------------------------------------------
def init_params(key, channels, kv_channels):
    keys = jax.random.split(key, 3 + 4 * len(kv_channels))
    ki = iter(keys)
    params = {
        "w_q": jax.random.normal(next(ki), (channels, channels), jnp.float32) * 0.05,
        "w_proj": jax.random.normal(next(ki), (channels, channels), jnp.float32) * 0.05,
        "b_proj": jax.random.normal(next(ki), (channels,), jnp.float32) * 0.05,
        "scales": [],
    }
    for c in kv_channels:
        params["scales"].append({
            "w_kv": jax.random.normal(next(ki), (c, 2 * c), jnp.float32) * 0.05,
            "w_mlp": jax.random.normal(next(ki), (c, c), jnp.float32) * 0.05,
            "b_mlp": jax.random.normal(next(ki), (c,), jnp.float32) * 0.05,
            "gamma": jnp.ones((c,), jnp.float32),
            "beta": jnp.zeros((c,), jnp.float32),
        })
    return params


if __name__ == "__main__":
    B = 2
    num_heads = 4
    head_channels = 8
    channels = num_heads * head_channels          # 32
    kv_channels = [16, 16]                        # sum == channels
    N = 16
    N_list = [8, 4]

    key = jax.random.PRNGKey(0)
    kx, ky0, ky1, kp = jax.random.split(key, 4)
    x = jax.random.normal(kx, (B, channels, N), jnp.float32)
    y_list = [
        jax.random.normal(ky0, (B, kv_channels[0], N_list[0]), jnp.float32),
        jax.random.normal(ky1, (B, kv_channels[1], N_list[1]), jnp.float32),
    ]
    params = init_params(kp, channels, kv_channels)

    out = cascaded_pyramid_attention(
        x, y_list, params, num_heads=num_heads, kv_channels=kv_channels)
    out = jax.block_until_ready(out)

    ref = reference(x, y_list, params, num_heads=num_heads, kv_channels=kv_channels)
    assert out.shape == (B, channels, N)
    assert jnp.allclose(out, ref, rtol=2e-2, atol=2e-2), "mismatch vs reference"

    print("KERNEL_OK")
</pallas_src>

<mosaic_0001>
module attributes {stable_mosaic.version = 11 : i64} {
  func.func @_fused_scale_kernel(%arg0: i32, %arg1: i32, %arg2: memref<1x8x32xbf16, #tpu.memory_space<vmem>>, %arg3: memref<1x8x16xbf16, #tpu.memory_space<vmem>>, %arg4: memref<32x16xbf16, #tpu.memory_space<vmem>>, %arg5: memref<16x16xbf16, #tpu.memory_space<vmem>>, %arg6: memref<16x16xbf16, #tpu.memory_space<vmem>>, %arg7: memref<16x16xbf16, #tpu.memory_space<vmem>>, %arg8: memref<1x16xf32, #tpu.memory_space<vmem>>, %arg9: memref<1x16xf32, #tpu.memory_space<vmem>>, %arg10: memref<1x16xf32, #tpu.memory_space<vmem>>, %arg11: memref<1x8x16xbf16, #tpu.memory_space<vmem>>, %arg12: memref<8x16xbf16, #tpu.memory_space<vmem>>, %arg13: memref<8x16xbf16, #tpu.memory_space<vmem>>) attributes {dimension_semantics = [#tpu.dimension_semantics<parallel>, #tpu.dimension_semantics<arbitrary>], iteration_bounds = array<i64: 2, 2>, scalar_prefetch = 0 : i64, scratch_operands = 2 : i64, tpu.core_type = #tpu.core_type<tc>, window_params = [{transform_indices = @transform_0, window_bounds = array<i64: 1, 8, 32>}, {transform_indices = @transform_1, window_bounds = array<i64: 1, 8, 16>}, {pipeline_mode = #tpu.pipeline_mode<synchronous>, transform_indices = @transform_2, window_bounds = array<i64: 32, 16>}, {pipeline_mode = #tpu.pipeline_mode<synchronous>, transform_indices = @transform_3, window_bounds = array<i64: 16, 16>}, {pipeline_mode = #tpu.pipeline_mode<synchronous>, transform_indices = @transform_4, window_bounds = array<i64: 16, 16>}, {pipeline_mode = #tpu.pipeline_mode<synchronous>, transform_indices = @transform_5, window_bounds = array<i64: 16, 16>}, {pipeline_mode = #tpu.pipeline_mode<synchronous>, transform_indices = @transform_6, window_bounds = array<i64: 1, 16>}, {pipeline_mode = #tpu.pipeline_mode<synchronous>, transform_indices = @transform_7, window_bounds = array<i64: 1, 16>}, {pipeline_mode = #tpu.pipeline_mode<synchronous>, transform_indices = @transform_8, window_bounds = array<i64: 1, 16>}, {transform_indices = @transform_9, window_bounds = array<i64: 1, 8, 16>}]} {
    %c0_i32 = arith.constant 0 : i32
    %0 = arith.cmpi eq, %arg1, %c0_i32 : i32
    %1 = arith.extui %0 : i1 to i32
    %c0_i32_0 = arith.constant 0 : i32
    %2 = arith.cmpi ne, %1, %c0_i32_0 : i32
    scf.if %2 {
      %c0_43 = arith.constant 0 : index
      %c0_44 = arith.constant 0 : index
      %c0_45 = arith.constant 0 : index
      %84 = vector.load %arg3[%c0_43, %c0_44, %c0_45] : memref<1x8x16xbf16, #tpu.memory_space<vmem>>, vector<1x8x16xbf16>
      %85 = vector.shape_cast %84 : vector<1x8x16xbf16> to vector<8x16xbf16>
      %c0_46 = arith.constant 0 : index
      %c0_47 = arith.constant 0 : index
      %86 = vector.load %arg5[%c0_46, %c0_47] : memref<16x16xbf16, #tpu.memory_space<vmem>>, vector<16x16xbf16>
      %cst_48 = arith.constant dense<0.000000e+00> : vector<8x16xf32>
      %87 = tpu.matmul %85, %86, %cst_48 {dimension_numbers = #tpu.dot_dimension_numbers<[1], [0], [0], [1], [0, 0, 1, 1], [], []>} : vector<8x16xbf16>, vector<16x16xbf16>, vector<8x16xf32> -> vector<8x16xf32>
      %c0_49 = arith.constant 0 : index
      %c0_50 = arith.constant 0 : index
      %88 = vector.load %arg6[%c0_49, %c0_50] : memref<16x16xbf16, #tpu.memory_space<vmem>>, vector<16x16xbf16>
      %cst_51 = arith.constant dense<0.000000e+00> : vector<8x16xf32>
      %89 = tpu.matmul %85, %88, %cst_51 {dimension_numbers = #tpu.dot_dimension_numbers<[1], [0], [0], [1], [0, 0, 1, 1], [], []>} : vector<8x16xbf16>, vector<16x16xbf16>, vector<8x16xf32> -> vector<8x16xf32>
      %90 = arith.truncf %87 : vector<8x16xf32> to vector<8x16xbf16>
      %c0_52 = arith.constant 0 : index
      %c0_53 = arith.constant 0 : index
      %91 = vector.load %arg12[%c0_52, %c0_53] : memref<8x16xbf16, #tpu.memory_space<vmem>>, vector<8x16xbf16>
      tpu.vector_store %arg12[%c0_52, %c0_53], %90 {strides = array<i32>} : memref<8x16xbf16, #tpu.memory_space<vmem>>, vector<8x16xbf16>,
      %92 = arith.truncf %89 : vector<8x16xf32> to vector<8x16xbf16>
      %c0_54 = arith.constant 0 : index
      %c0_55 = arith.constant 0 : index
      %93 = vector.load %arg13[%c0_54, %c0_55] : memref<8x16xbf16, #tpu.memory_space<vmem>>, vector<8x16xbf16>
      tpu.vector_store %arg13[%c0_54, %c0_55], %92 {strides = array<i32>} : memref<8x16xbf16, #tpu.memory_space<vmem>>, vector<8x16xbf16>,
    } else {
    }
    %c0 = arith.constant 0 : index
    %c0_1 = arith.constant 0 : index
    %c0_2 = arith.constant 0 : index
    %3 = vector.load %arg2[%c0, %c0_1, %c0_2] : memref<1x8x32xbf16, #tpu.memory_space<vmem>>, vector<1x8x32xbf16>
    %4 = vector.shape_cast %3 : vector<1x8x32xbf16> to vector<8x32xbf16>
    %c0_3 = arith.constant 0 : index
    %c0_4 = arith.constant 0 : index
    %5 = vector.load %arg4[%c0_3, %c0_4] : memref<32x16xbf16, #tpu.memory_space<vmem>>, vector<32x16xbf16>
    %cst = arith.constant dense<0.000000e+00> : vector<8x16xf32>
    %6 = tpu.matmul %4, %5, %cst {dimension_numbers = #tpu.dot_dimension_numbers<[1], [0], [0], [1], [0, 0, 1, 1], [], []>} : vector<8x32xbf16>, vector<32x16xbf16>, vector<8x16xf32> -> vector<8x16xf32>
    %cst_5 = arith.constant 0.353553385 : f32
    %7 = vector.broadcast %cst_5 : f32 to vector<8x16xf32>
    %8 = arith.mulf %6, %7 : vector<8x16xf32>
    %9 = arith.truncf %8 : vector<8x16xf32> to vector<8x16xbf16>
    %cst_6 = arith.constant 0.000000e+00 : f32
    %10 = vector.broadcast %cst_6 : f32 to vector<8x16xf32>
    %11 = vector.extract_strided_slice %9 {offsets = [0, 0], sizes = [8, 8], strides = [1, 1]} : vector<8x16xbf16> to vector<8x8xbf16>
    %c0_7 = arith.constant 0 : index
    %c0_8 = arith.constant 0 : index
    %12 = vector.load %arg12[%c0_7, %c0_8] : memref<8x16xbf16, #tpu.memory_space<vmem>>, vector<8x8xbf16>
    %c0_9 = arith.constant 0 : index
    %c0_10 = arith.constant 0 : index
    %13 = vector.load %arg13[%c0_9, %c0_10] : memref<8x16xbf16, #tpu.memory_space<vmem>>, vector<8x8xbf16>
    %cst_11 = arith.constant dense<0.000000e+00> : vector<8x8xf32>
    %14 = tpu.matmul %11, %12, %cst_11 {dimension_numbers = #tpu.dot_dimension_numbers<[1], [1], [0], [0], [0, 0, 1, 0], [], []>} : vector<8x8xbf16>, vector<8x8xbf16>, vector<8x8xf32> -> vector<8x8xf32>
    %cst_12 = arith.constant dense<0xFF800000> : vector<8xf32>
    %15 = vector.multi_reduction <maximumf>, %14, %cst_12 [1] : vector<8x8xf32> to vector<8xf32>
    %16 = vector.shape_cast %15 : vector<8xf32> to vector<8x1xf32>
    %17 = vector.broadcast %16 : vector<8x1xf32> to vector<8x8xf32>
    %18 = arith.subf %14, %17 : vector<8x8xf32>
    %19 = math.exp %18 : vector<8x8xf32>
    %cst_13 = arith.constant dense<0.000000e+00> : vector<8xf32>
    %20 = vector.multi_reduction <add>, %19, %cst_13 [1] : vector<8x8xf32> to vector<8xf32>
    %21 = vector.shape_cast %20 : vector<8xf32> to vector<8x1xf32>
    %22 = tpu.reciprocal %21 {approx = true} : vector<8x1xf32> -> vector<8x1xf32>
    %23 = vector.broadcast %22 : vector<8x1xf32> to vector<8x8xf32>
    %24 = arith.mulf %19, %23 : vector<8x8xf32>
    %25 = arith.truncf %24 : vector<8x8xf32> to vector<8x8xbf16>
    %cst_14 = arith.constant dense<0.000000e+00> : vector<8x8xf32>
    %26 = tpu.matmul %25, %13, %cst_14 {dimension_numbers = #tpu.dot_dimension_numbers<[1], [0], [0], [1], [0, 0, 1, 1], [], []>} : vector<8x8xbf16>, vector<8x8xbf16>, vector<8x8xf32> -> vector<8x8xf32>
    %27 = arith.truncf %26 : vector<8x8xf32> to vector<8x8xbf16>
    %c0_15 = arith.constant 0 : index
    %c0_16 = arith.constant 0 : index
    %28 = vector.load %arg7[%c0_15, %c0_16] : memref<16x16xbf16, #tpu.memory_space<vmem>>, vector<8x16xbf16>
    %cst_17 = arith.constant dense<0.000000e+00> : vector<8x16xf32>
    %29 = tpu.matmul %27, %28, %cst_17 {dimension_numbers = #tpu.dot_dimension_numbers<[1], [0], [0], [1], [0, 0, 1, 1], [], []>} : vector<8x8xbf16>, vector<8x16xbf16>, vector<8x16xf32> -> vector<8x16xf32>
    %30 = arith.addf %10, %29 : vector<8x16xf32>
    %31 = vector.extract_strided_slice %9 {offsets = [0, 8], sizes = [8, 8], strides = [1, 1]} : vector<8x16xbf16> to vector<8x8xbf16>
    %c0_18 = arith.constant 0 : index
    %c8 = arith.constant 8 : index
    %32 = vector.load %arg12[%c0_18, %c8] : memref<8x16xbf16, #tpu.memory_space<vmem>>, vector<8x8xbf16>
    %c0_19 = arith.constant 0 : index
    %c8_20 = arith.constant 8 : index
    %33 = vector.load %arg13[%c0_19, %c8_20] : memref<8x16xbf16, #tpu.memory_space<vmem>>, vector<8x8xbf16>
    %cst_21 = arith.constant dense<0.000000e+00> : vector<8x8xf32>
    %34 = tpu.matmul %31, %32, %cst_21 {dimension_numbers = #tpu.dot_dimension_numbers<[1], [1], [0], [0], [0, 0, 1, 0], [], []>} : vector<8x8xbf16>, vector<8x8xbf16>, vector<8x8xf32> -> vector<8x8xf32>
    %cst_22 = arith.constant dense<0xFF800000> : vector<8xf32>
    %35 = vector.multi_reduction <maximumf>, %34, %cst_22 [1] : vector<8x8xf32> to vector<8xf32>
    %36 = vector.shape_cast %35 : vector<8xf32> to vector<8x1xf32>
    %37 = vector.broadcast %36 : vector<8x1xf32> to vector<8x8xf32>
    %38 = arith.subf %34, %37 : vector<8x8xf32>
    %39 = math.exp %38 : vector<8x8xf32>
    %cst_23 = arith.constant dense<0.000000e+00> : vector<8xf32>
    %40 = vector.multi_reduction <add>, %39, %cst_23 [1] : vector<8x8xf32> to vector<8xf32>
    %41 = vector.shape_cast %40 : vector<8xf32> to vector<8x1xf32>
    %42 = tpu.reciprocal %41 {approx = true} : vector<8x1xf32> -> vector<8x1xf32>
    %43 = vector.broadcast %42 : vector<8x1xf32> to vector<8x8xf32>
    %44 = arith.mulf %39, %43 : vector<8x8xf32>
    %45 = arith.truncf %44 : vector<8x8xf32> to vector<8x8xbf16>
    %cst_24 = arith.constant dense<0.000000e+00> : vector<8x8xf32>
    %46 = tpu.matmul %45, %33, %cst_24 {dimension_numbers = #tpu.dot_dimension_numbers<[1], [0], [0], [1], [0, 0, 1, 1], [], []>} : vector<8x8xbf16>, vector<8x8xbf16>, vector<8x8xf32> -> vector<8x8xf32>
    %47 = arith.truncf %46 : vector<8x8xf32> to vector<8x8xbf16>
    %c8_25 = arith.constant 8 : index
    %c0_26 = arith.constant 0 : index
    %48 = vector.load %arg7[%c8_25, %c0_26] : memref<16x16xbf16, #tpu.memory_space<vmem>>, vector<8x16xbf16>
    %cst_27 = arith.constant dense<0.000000e+00> : vector<8x16xf32>
    %49 = tpu.matmul %47, %48, %cst_27 {dimension_numbers = #tpu.dot_dimension_numbers<[1], [0], [0], [1], [0, 0, 1, 1], [], []>} : vector<8x8xbf16>, vector<8x16xbf16>, vector<8x16xf32> -> vector<8x16xf32>
    %50 = arith.addf %30, %49 : vector<8x16xf32>
    %c0_28 = arith.constant 0 : index
    %c0_29 = arith.constant 0 : index
    %51 = vector.load %arg8[%c0_28, %c0_29] : memref<1x16xf32, #tpu.memory_space<vmem>>, vector<1x16xf32>
    %52 = vector.broadcast %51 : vector<1x16xf32> to vector<8x16xf32>
    %53 = arith.addf %50, %52 : vector<8x16xf32>
    %cst_30 = arith.constant dense<0.000000e+00> : vector<8xf32>
    %54 = vector.multi_reduction <add>, %53, %cst_30 [1] : vector<8x16xf32> to vector<8xf32>
    %55 = vector.shape_cast %54 : vector<8xf32> to vector<8x1xf32>
    %cst_31 = arith.constant 1.600000e+01 : f32
    %56 = vector.broadcast %cst_31 : f32 to vector<8x1xf32>
    %57 = arith.divf %55, %56 : vector<8x1xf32>
    %58 = vector.broadcast %57 : vector<8x1xf32> to vector<8x16xf32>
    %59 = arith.subf %53, %58 : vector<8x16xf32>
    %60 = arith.mulf %59, %59 : vector<8x16xf32>
    %cst_32 = arith.constant dense<0.000000e+00> : vector<8xf32>
    %61 = vector.multi_reduction <add>, %60, %cst_32 [1] : vector<8x16xf32> to vector<8xf32>
    %62 = vector.shape_cast %61 : vector<8xf32> to vector<8x1xf32>
    %cst_33 = arith.constant 1.600000e+01 : f32
    %63 = vector.broadcast %cst_33 : f32 to vector<8x1xf32>
    %64 = arith.divf %62, %63 : vector<8x1xf32>
    %65 = vector.broadcast %57 : vector<8x1xf32> to vector<8x16xf32>
    %66 = arith.subf %53, %65 : vector<8x16xf32>
    %cst_34 = arith.constant 9.99999974E-6 : f32
    %67 = vector.broadcast %cst_34 : f32 to vector<8x1xf32>
    %68 = arith.addf %64, %67 : vector<8x1xf32>
    %69 = math.rsqrt %68 : vector<8x1xf32>
    %70 = vector.broadcast %69 : vector<8x1xf32> to vector<8x16xf32>
    %71 = arith.mulf %66, %70 : vector<8x16xf32>
    %c0_35 = arith.constant 0 : index
    %c0_36 = arith.constant 0 : index
    %72 = vector.load %arg9[%c0_35, %c0_36] : memref<1x16xf32, #tpu.memory_space<vmem>>, vector<1x16xf32>
    %73 = vector.broadcast %72 : vector<1x16xf32> to vector<8x16xf32>
    %74 = arith.mulf %71, %73 : vector<8x16xf32>
    %c0_37 = arith.constant 0 : index
    %c0_38 = arith.constant 0 : index
    %75 = vector.load %arg10[%c0_37, %c0_38] : memref<1x16xf32, #tpu.memory_space<vmem>>, vector<1x16xf32>
    %76 = vector.broadcast %75 : vector<1x16xf32> to vector<8x16xf32>
    %77 = arith.addf %74, %76 : vector<8x16xf32>
    %cst_39 = arith.constant 0.000000e+00 : f32
    %78 = vector.broadcast %cst_39 : f32 to vector<8x16xf32>
    %79 = arith.maximumf %77, %78 : vector<8x16xf32>
    %80 = arith.truncf %79 : vector<8x16xf32> to vector<8x16xbf16>
    %c0_40 = arith.constant 0 : index
    %c0_41 = arith.constant 0 : index
    %c0_42 = arith.constant 0 : index
    %81 = vector.load %arg11[%c0_40, %c0_41, %c0_42] : memref<1x8x16xbf16, #tpu.memory_space<vmem>>, vector<1x8x16xbf16>
    %82 = vector.shape_cast %81 : vector<1x8x16xbf16> to vector<8x16xbf16>
    %83 = vector.shape_cast %80 : vector<8x16xbf16> to vector<1x8x16xbf16>
    tpu.vector_store %arg11[%c0_40, %c0_41, %c0_42], %83 {strides = array<i32>} : memref<1x8x16xbf16, #tpu.memory_space<vmem>>, vector<1x8x16xbf16>,
    return
  }
  func.func @transform_0(%arg0: i32, %arg1: i32) -> (i32, i32, i32) {
    %c0_i32 = arith.constant 0 : i32
    %c0_i32_0 = arith.constant 0 : i32
    return %arg0, %arg1, %c0_i32 : i32, i32, i32
  }
  func.func @transform_1(%arg0: i32, %arg1: i32) -> (i32, i32, i32) {
    %c0_i32 = arith.constant 0 : i32
    %c0_i32_0 = arith.constant 0 : i32
    %c0_i32_1 = arith.constant 0 : i32
    return %arg0, %c0_i32, %c0_i32_0 : i32, i32, i32
  }
  func.func @transform_2(%arg0: i32, %arg1: i32) -> (i32, i32) {
    %c0_i32 = arith.constant 0 : i32
    %c0_i32_0 = arith.constant 0 : i32
    %c0_i32_1 = arith.constant 0 : i32
    return %c0_i32, %c0_i32_0 : i32, i32
  }
  func.func @transform_3(%arg0: i32, %arg1: i32) -> (i32, i32) {
    %c0_i32 = arith.constant 0 : i32
    %c0_i32_0 = arith.constant 0 : i32
    %c0_i32_1 = arith.constant 0 : i32
    return %c0_i32, %c0_i32_0 : i32, i32
  }
  func.func @transform_4(%arg0: i32, %arg1: i32) -> (i32, i32) {
    %c0_i32 = arith.constant 0 : i32
    %c0_i32_0 = arith.constant 0 : i32
    %c0_i32_1 = arith.constant 0 : i32
    return %c0_i32, %c0_i32_0 : i32, i32
  }
  func.func @transform_5(%arg0: i32, %arg1: i32) -> (i32, i32) {
    %c0_i32 = arith.constant 0 : i32
    %c0_i32_0 = arith.constant 0 : i32
    %c0_i32_1 = arith.constant 0 : i32
    return %c0_i32, %c0_i32_0 : i32, i32
  }
  func.func @transform_6(%arg0: i32, %arg1: i32) -> (i32, i32) {
    %c0_i32 = arith.constant 0 : i32
    %c0_i32_0 = arith.constant 0 : i32
    %c0_i32_1 = arith.constant 0 : i32
    return %c0_i32, %c0_i32_0 : i32, i32
  }
  func.func @transform_7(%arg0: i32, %arg1: i32) -> (i32, i32) {
    %c0_i32 = arith.constant 0 : i32
    %c0_i32_0 = arith.constant 0 : i32
    %c0_i32_1 = arith.constant 0 : i32
    return %c0_i32, %c0_i32_0 : i32, i32
  }
  func.func @transform_8(%arg0: i32, %arg1: i32) -> (i32, i32) {
    %c0_i32 = arith.constant 0 : i32
    %c0_i32_0 = arith.constant 0 : i32
    %c0_i32_1 = arith.constant 0 : i32
    return %c0_i32, %c0_i32_0 : i32, i32
  }
  func.func @transform_9(%arg0: i32, %arg1: i32) -> (i32, i32, i32) {
    %c0_i32 = arith.constant 0 : i32
    %c0_i32_0 = arith.constant 0 : i32
    return %arg0, %arg1, %c0_i32 : i32, i32, i32
  }
}

</mosaic_0001>

<llo_original>
// kernel: tpu_custom_call.1
$region0: #{tpu_custom_call.1}
  #allocation0 [shape = 'u32[]', space=smem, size = 0x4, offset = 0x4, fixed_abs, tag = 'smem constant byte address 0x4 - core index']
  #allocation1 [shape = 'u32[144,128]{1,0:T(1,128)}', space=vmem, size = 0x12000, scoped, tag = 'internal scratch']
  #allocation2 [shape = 'bf16[8,16]{1,0:T(8,128)(2,1)}', space=vmem, size = 0x800, scoped, tag = 'scratch operand']
  #allocation3 [shape = 'bf16[8,16]{1,0:T(8,128)(2,1)}', space=vmem, size = 0x800, scoped, tag = 'scratch operand']
  %s0 = inlined_call_operand.vmem [shape: bf16[2,16,32], index: 0, kind: input, shape index: {}]
  %s1 = inlined_call_operand.vmem [shape: bf16[2,8,16], index: 1, kind: input, shape index: {}]
  %s2 = inlined_call_operand.vmem [shape: bf16[32,16], index: 2, kind: input, shape index: {}]
  %s3 = inlined_call_operand.vmem [shape: bf16[16,16], index: 3, kind: input, shape index: {}]
  %s4 = inlined_call_operand.hbm [shape: bf16[16,16], index: 4, kind: input, shape index: {}]
  %s5 = inlined_call_operand.vmem [shape: bf16[16,16], index: 5, kind: input, shape index: {}]
  %s6 = inlined_call_operand.vmem [shape: f32[1,16], index: 6, kind: input, shape index: {}]
  %s7 = inlined_call_operand.vmem [shape: f32[1,16], index: 7, kind: input, shape index: {}]
  %s8 = inlined_call_operand.vmem [shape: f32[1,16], index: 8, kind: input, shape index: {}]
  %s9 = inlined_call_operand.hbm [shape: bf16[2,16,16], index: 9, kind: output, shape index: {}]
  %s10 = sld [smem:[#allocation0]]
  $region77: #{tpu_custom_call.1} parent=0
    _
  %s12 = ssub.s32 1, %s10
  %s13 = scalar_select 0, %s12, %s10
  $region1: #{tpu_custom_call.1} parent=0
    #allocation4 [shape = 'u8[4096]{0}', space=vmem, size = 0x1000, scoped, tag = 'input window, operand 4, single buffered']
    #allocation5 [shape = 's32[2]{0}', space=sflag, size = 0x8, scoped, tag = 'scoped memory for tpu_custom_call.1']
    #allocation6 [shape = 's32[2]{0}', space=sflag, size = 0x8, scoped, tag = 'scoped memory for tpu_custom_call.1']
    #allocation7 [shape = 'u8[4096]{0}', space=vmem, size = 0x1000, scoped, tag = 'output window, operand 0']
    %14 = vsyncpa [#allocation5], 0
    %15 = vsyncpa [#allocation6], 0
    %s16 = scalar_lea.sflag [#allocation6], 1
    %17 = vsyncpa %s16, 0
    loop: start=0, step=1, limit=6
    $region2: #{tpu_custom_call.1} parent=1 // loop_pre_header
      _
    $region3: #{tpu_custom_call.1} parent=1 // loop_header
      %s19 = sphi 0, %s23
      %p20 = scmp.ge.s32.totalorder %s19, 6
      %s26 = sphi 0, %s38
      %s27 = sphi 0, %s34
      %s28 = sphi 0, %s26
      %s29 = sphi 0, %s27
      %s30 = sphi 0, %s28
      %s31 = sphi 0, %s29
      %s43 = sphi 0, %s45
      %s46 = sphi 0, %s43
      %s47 = sphi 0, %s46
      %s63 = sphi 0, %s47
      %s69 = sphi 0, %s71
      %s72 = sphi 0, %s69
      %s73 = sphi 0, %s72
      %s89 = sphi 0, %s73
      %s93 = sphi 0, %s93
      %s95 = sphi 0, %s93
      %s96 = sphi 0, %s95
      %s110 = sphi 0, %s96
      %s114 = sphi 0, %s114
      %s116 = sphi 0, %s114
      %s117 = sphi 0, %s116
      %s131 = sphi 0, %s117
      %s135 = sphi 0, %s135
      %s137 = sphi 0, %s135
      %s138 = sphi 0, %s137
      %s152 = sphi 0, %s138
      %s156 = sphi 0, %s156
      %s158 = sphi 0, %s156
      %s159 = sphi 0, %s158
      %s173 = sphi 0, %s159
      %s177 = sphi 0, %s177
      %s179 = sphi 0, %s177
      %s180 = sphi 0, %s179
      %s194 = sphi 0, %s180
      %s198 = sphi 0, %s198
      %s200 = sphi 0, %s198
      %s201 = sphi 0, %s200
      %s215 = sphi 0, %s201
      %s219 = sphi 0, %s219
      %s221 = sphi 0, %s219
      %s222 = sphi 0, %s221
      %s236 = sphi 0, %s222
      %s244 = sphi 0, %s246
      %s247 = sphi 0, %s244
      %s248 = sphi 0, %s247
      %s264 = sphi 0, %s248
    $region4: #{tpu_custom_call.1} parent=1 // loop_header_branch
      %22 = sbr.rel (%p20) target = $region8
    $region5: #{tpu_custom_call.1} parent=1 // loop_body
      %s24 = ssub.s32 %s19, 1
      %s25 = ssub.s32 %s19, 2
      %s32 = sadd.s32 1, %s27
      %p33 = scmp.ge.s32.totalorder %s32, 2
      %s34 = scalar_select %p33, 0, %s32
      %s35 = sadd.s32 1, %s26
      %s36 = scalar_select %p33, %s35, %s26
      %p37 = scmp.ge.s32.totalorder %s36, 2
      %s38 = scalar_select %p37, 0, %s36
      %s39 = ssub.s32 %s26, %s38
      %s40 = ssub.s32 %s27, %s34
      %s41 = sor.u32 %s39, %s40
      %p42 = scmp.eq.s32.totalorder %s41, 0
      %s44 = sadd.s32 %s43, 1
      %s45 = scalar_select %p42, %s43, %s44
      %p48 = pneg %p42
      %p49 = scmp.eq.s32.totalorder %s19, 3
      %p50 = por %p48, %p49
      %p51 = scmp.ne.s32.totalorder %s43, %s46
      %p52 = scmp.eq.s32.totalorder %s19, 0
      %p53 = por %p51, %p52
      %p54 = scmp.ne.s32.totalorder %s43, %s46
      %p55 = scmp.eq.s32.totalorder %s24, 3
      %p56 = por %p54, %p55
      %p57 = scmp.ne.s32.totalorder %s46, %s47
      %p58 = scmp.eq.s32.totalorder %s24, 0
      %p59 = por %p57, %p58
      %p60 = scmp.ne.s32.totalorder %s46, %s47
      %p61 = scmp.eq.s32.totalorder %s25, 3
      %p62 = por %p60, %p61
      %p64 = scmp.ne.s32.totalorder %s47, %s63
      %p65 = scmp.eq.s32.totalorder %s25, 0
      %p66 = por %p64, %p65
      %s67 = ssub.s32 %s26, %s38
      %p68 = scmp.eq.s32.totalorder %s67, 0
      %s70 = sadd.s32 %s69, 1
      %s71 = scalar_select %p68, %s69, %s70
      %p74 = pneg %p68
      %p75 = scmp.eq.s32.totalorder %s19, 3
      %p76 = por %p74, %p75
      %p77 = scmp.ne.s32.totalorder %s69, %s72
      %p78 = scmp.eq.s32.totalorder %s19, 0
      %p79 = por %p77, %p78
      %p80 = scmp.ne.s32.totalorder %s69, %s72
      %p81 = scmp.eq.s32.totalorder %s24, 3
      %p82 = por %p80, %p81
      %p83 = scmp.ne.s32.totalorder %s72, %s73
      %p84 = scmp.eq.s32.totalorder %s24, 0
      %p85 = por %p83, %p84
      %p86 = scmp.ne.s32.totalorder %s72, %s73
      %p87 = scmp.eq.s32.totalorder %s25, 3
      %p88 = por %p86, %p87
      %p90 = scmp.ne.s32.totalorder %s73, %s89
      %p91 = scmp.eq.s32.totalorder %s25, 0
      %p92 = por %p90, %p91
      %s94 = sadd.s32 %s93, 1
      %p97 = scmp.eq.s32.totalorder %s19, 3
      %p98 = scmp.ne.s32.totalorder %s93, %s95
      %p99 = scmp.eq.s32.totalorder %s19, 0
      %p100 = por %p98, %p99
      %p101 = scmp.ne.s32.totalorder %s93, %s95
      %p102 = scmp.eq.s32.totalorder %s24, 3
      %p103 = por %p101, %p102
      %p104 = scmp.ne.s32.totalorder %s95, %s96
      %p105 = scmp.eq.s32.totalorder %s24, 0
      %p106 = por %p104, %p105
      %p107 = scmp.ne.s32.totalorder %s95, %s96
      %p108 = scmp.eq.s32.totalorder %s25, 3
      %p109 = por %p107, %p108
      %p111 = scmp.ne.s32.totalorder %s96, %s110
      %p112 = scmp.eq.s32.totalorder %s25, 0
      %p113 = por %p111, %p112
      %s115 = sadd.s32 %s114, 1
      %p118 = scmp.eq.s32.totalorder %s19, 3
      %p119 = scmp.ne.s32.totalorder %s114, %s116
      %p120 = scmp.eq.s32.totalorder %s19, 0
      %p121 = por %p119, %p120
      %p122 = scmp.ne.s32.totalorder %s114, %s116
      %p123 = scmp.eq.s32.totalorder %s24, 3
      %p124 = por %p122, %p123
      %p125 = scmp.ne.s32.totalorder %s116, %s117
      %p126 = scmp.eq.s32.totalorder %s24, 0
      %p127 = por %p125, %p126
      %p128 = scmp.ne.s32.totalorder %s116, %s117
      %p129 = scmp.eq.s32.totalorder %s25, 3
      %p130 = por %p128, %p129
      %p132 = scmp.ne.s32.totalorder %s117, %s131
      %p133 = scmp.eq.s32.totalorder %s25, 0
      %p134 = por %p132, %p133
      %s136 = sadd.s32 %s135, 1
      %p139 = scmp.eq.s32.totalorder %s19, 3
      %p140 = scmp.ne.s32.totalorder %s135, %s137
      %p141 = scmp.eq.s32.totalorder %s19, 0
      %p142 = por %p140, %p141
      %p143 = scmp.ne.s32.totalorder %s135, %s137
      %p144 = scmp.eq.s32.totalorder %s24, 3
      %p145 = por %p143, %p144
      %p146 = scmp.ne.s32.totalorder %s137, %s138
      %p147 = scmp.eq.s32.totalorder %s24, 0
      %p148 = por %p146, %p147
      %p149 = scmp.ne.s32.totalorder %s137, %s138
      %p150 = scmp.eq.s32.totalorder %s25, 3
      %p151 = por %p149, %p150
      %p153 = scmp.ne.s32.totalorder %s138, %s152
      %p154 = scmp.eq.s32.totalorder %s25, 0
      %p155 = por %p153, %p154
      %s157 = sadd.s32 %s156, 1
      %p160 = scmp.eq.s32.totalorder %s19, 3
      %p161 = scmp.ne.s32.totalorder %s156, %s158
      %p162 = scmp.eq.s32.totalorder %s19, 0
      %p163 = por %p161, %p162
      %p164 = scmp.ne.s32.totalorder %s156, %s158
      %p165 = scmp.eq.s32.totalorder %s24, 3
      %p166 = por %p164, %p165
      %p167 = scmp.ne.s32.totalorder %s158, %s159
      %p168 = scmp.eq.s32.totalorder %s24, 0
      %p169 = por %p167, %p168
      %p170 = scmp.ne.s32.totalorder %s158, %s159
      %p171 = scmp.eq.s32.totalorder %s25, 3
      %p172 = por %p170, %p171
      %p174 = scmp.ne.s32.totalorder %s159, %s173
      %p175 = scmp.eq.s32.totalorder %s25, 0
      %p176 = por %p174, %p175
      %s178 = sadd.s32 %s177, 1
      %p181 = scmp.eq.s32.totalorder %s19, 3
      %p182 = scmp.ne.s32.totalorder %s177, %s179
      %p183 = scmp.eq.s32.totalorder %s19, 0
      %p184 = por %p182, %p183
      %p185 = scmp.ne.s32.totalorder %s177, %s179
      %p186 = scmp.eq.s32.totalorder %s24, 3
      %p187 = por %p185, %p186
      %p188 = scmp.ne.s32.totalorder %s179, %s180
      %p189 = scmp.eq.s32.totalorder %s24, 0
      %p190 = por %p188, %p189
      %p191 = scmp.ne.s32.totalorder %s179, %s180
      %p192 = scmp.eq.s32.totalorder %s25, 3
      %p193 = por %p191, %p192
      %p195 = scmp.ne.s32.totalorder %s180, %s194
      %p196 = scmp.eq.s32.totalorder %s25, 0
      %p197 = por %p195, %p196
      %s199 = sadd.s32 %s198, 1
      %p202 = scmp.eq.s32.totalorder %s19, 3
      %p203 = scmp.ne.s32.totalorder %s198, %s200
      %p204 = scmp.eq.s32.totalorder %s19, 0
      %p205 = por %p203, %p204
      %p206 = scmp.ne.s32.totalorder %s198, %s200
      %p207 = scmp.eq.s32.totalorder %s24, 3
      %p208 = por %p206, %p207
      %p209 = scmp.ne.s32.totalorder %s200, %s201
      %p210 = scmp.eq.s32.totalorder %s24, 0
      %p211 = por %p209, %p210
      %p212 = scmp.ne.s32.totalorder %s200, %s201
      %p213 = scmp.eq.s32.totalorder %s25, 3
      %p214 = por %p212, %p213
      %p216 = scmp.ne.s32.totalorder %s201, %s215
      %p217 = scmp.eq.s32.totalorder %s25, 0
      %p218 = por %p216, %p217
      %s220 = sadd.s32 %s219, 1
      %p223 = scmp.eq.s32.totalorder %s19, 3
      %p224 = scmp.ne.s32.totalorder %s219, %s221
      %p225 = scmp.eq.s32.totalorder %s19, 0
      %p226 = por %p224, %p225
      %p227 = scmp.ne.s32.totalorder %s219, %s221
      %p228 = scmp.eq.s32.totalorder %s24, 3
      %p229 = por %p227, %p228
      %p230 = scmp.ne.s32.totalorder %s221, %s222
      %p231 = scmp.eq.s32.totalorder %s24, 0
      %p232 = por %p230, %p231
      %p233 = scmp.ne.s32.totalorder %s221, %s222
      %p234 = scmp.eq.s32.totalorder %s25, 3
      %p235 = por %p233, %p234
      %p237 = scmp.ne.s32.totalorder %s222, %s236
      %p238 = scmp.eq.s32.totalorder %s25, 0
      %p239 = por %p237, %p238
      %s240 = ssub.s32 %s26, %s38
      %s241 = ssub.s32 %s27, %s34
      %s242 = sor.u32 %s240, %s241
      %p243 = scmp.eq.s32.totalorder %s242, 0
      %s245 = sadd.s32 %s244, 1
      %s246 = scalar_select %p243, %s244, %s245
      %p249 = pneg %p243
      %p250 = scmp.eq.s32.totalorder %s19, 3
      %p251 = por %p249, %p250
      %p252 = scmp.ne.s32.totalorder %s244, %s247
      %p253 = scmp.eq.s32.totalorder %s19, 0
      %p254 = por %p252, %p253
      %p255 = scmp.ne.s32.totalorder %s244, %s247
      %p256 = scmp.eq.s32.totalorder %s24, 3
      %p257 = por %p255, %p256
      %p258 = scmp.ne.s32.totalorder %s247, %s248
      %p259 = scmp.eq.s32.totalorder %s24, 0
      %p260 = por %p258, %p259
      %p261 = scmp.ne.s32.totalorder %s247, %s248
      %p262 = scmp.eq.s32.totalorder %s25, 3
      %p263 = por %p261, %p262
      %p265 = scmp.ne.s32.totalorder %s248, %s264
      %p266 = scmp.eq.s32.totalorder %s25, 0
      %p267 = por %p265, %p266
      %p268 = scmp.le.s32.totalorder 1, %s19
      %p269 = scmp.lt.s32.totalorder %s19, 5
      %p270 = pnand %p268, %p269
      %p271 = pneg %p270
      // Predicated region
      $region9: #{tpu_custom_call.1} parent=5 // pred_check
        _
      $region10: #{tpu_custom_call.1} parent=5 // pred_check_branch
        %273 = sbr.rel (%p270) target = $region12
      $region11: #{tpu_custom_call.1} parent=5 // pred_region
        %s274 = ssub.s32 %s19, 1
        // Predicated region
        $region13: #{tpu_custom_call.1} parent=11 // pred_check
          %p275 = pneg %p106
        $region14: #{tpu_custom_call.1} parent=11 // pred_check_branch
          %277 = sbr.rel (%p275) target = $region16
        $region15: #{tpu_custom_call.1} parent=11 // pred_region
          _
        $region16: #{tpu_custom_call.1} parent=11 // pred_fallthru
          _
        // Predicated region
        $region17: #{tpu_custom_call.1} parent=11 // pred_check
          %p278 = pneg %p127
        $region18: #{tpu_custom_call.1} parent=11 // pred_check_branch
          %280 = sbr.rel (%p278) target = $region20
        $region19: #{tpu_custom_call.1} parent=11 // pred_region
          _
        $region20: #{tpu_custom_call.1} parent=11 // pred_fallthru
          _
        // Predicated region
        $region21: #{tpu_custom_call.1} parent=11 // pred_check
          %p281 = pneg %p148
        $region22: #{tpu_custom_call.1} parent=11 // pred_check_branch
          %283 = sbr.rel (%p281) target = $region24
        $region23: #{tpu_custom_call.1} parent=11 // pred_region
          %s285 = ssub.s32 128, 128
          %286 = vsyncadd [#allocation5], %s285
          %s287 = sshll.u32 [#allocation4], 4
          %s288 = int_to_ptr.vmem [resolvable:$true] %s287
          %293 = dma.hbm_to_vmem [thread:$0]  %s4, 128, %s288, [#allocation5], 64, 64, 4
        $region24: #{tpu_custom_call.1} parent=11 // pred_fallthru
          _
        // Predicated region
        $region25: #{tpu_custom_call.1} parent=11 // pred_check
          %p294 = pneg %p169
        $region26: #{tpu_custom_call.1} parent=11 // pred_check_branch
          %296 = sbr.rel (%p294) target = $region28
        $region27: #{tpu_custom_call.1} parent=11 // pred_region
          _
        $region28: #{tpu_custom_call.1} parent=11 // pred_fallthru
          _
        // Predicated region
        $region29: #{tpu_custom_call.1} parent=11 // pred_check
          %p297 = pneg %p190
        $region30: #{tpu_custom_call.1} parent=11 // pred_check_branch
          %299 = sbr.rel (%p297) target = $region32
        $region31: #{tpu_custom_call.1} parent=11 // pred_region
          _
        $region32: #{tpu_custom_call.1} parent=11 // pred_fallthru
          _
        // Predicated region
        $region33: #{tpu_custom_call.1} parent=11 // pred_check
          %p300 = pneg %p211
        $region34: #{tpu_custom_call.1} parent=11 // pred_check_branch
          %302 = sbr.rel (%p300) target = $region36
        $region35: #{tpu_custom_call.1} parent=11 // pred_region
          _
        $region36: #{tpu_custom_call.1} parent=11 // pred_fallthru
          _
        // Predicated region
        $region37: #{tpu_custom_call.1} parent=11 // pred_check
          %p303 = pneg %p232
        $region38: #{tpu_custom_call.1} parent=11 // pred_check_branch
          %305 = sbr.rel (%p303) target = $region40
        $region39: #{tpu_custom_call.1} parent=11 // pred_region
          _
        $region40: #{tpu_custom_call.1} parent=11 // pred_fallthru
          _
      $region12: #{tpu_custom_call.1} parent=5 // pred_fallthru
        _
      %p306 = scmp.lt.s32.totalorder %s19, 4
      // Predicated region
      $region41: #{tpu_custom_call.1} parent=5 // pred_check
        %p307 = pneg %p306
      $region42: #{tpu_custom_call.1} parent=5 // pred_check_branch
        %309 = sbr.rel (%p307) target = $region44
      $region43: #{tpu_custom_call.1} parent=5 // pred_region
        // Predicated region
        $region45: #{tpu_custom_call.1} parent=43 // pred_check
          %p310 = pneg %p53
        $region46: #{tpu_custom_call.1} parent=43 // pred_check_branch
          %312 = sbr.rel (%p310) target = $region48
        $region47: #{tpu_custom_call.1} parent=43 // pred_region
          %p313 = scmp.lt.s32.totalorder %s26, 1
          %s314 = scalar_select %p313, %s26, 1
          %p315 = scmp.lt.s32.totalorder %s27, 1
          %s316 = scalar_select %p315, %s27, 1
          %s317 = smul.addr %s314, 2
          %s318 = sadd.s32 %s316, %s317
          %s319 = smul.addr %s318, 4
          %s320 = scalar_lea.vmem %s0, %s319
        $region48: #{tpu_custom_call.1} parent=43 // pred_fallthru
          _
        // Predicated region
        $region49: #{tpu_custom_call.1} parent=43 // pred_check
          %p321 = pneg %p79
        $region50: #{tpu_custom_call.1} parent=43 // pred_check_branch
          %323 = sbr.rel (%p321) target = $region52
        $region51: #{tpu_custom_call.1} parent=43 // pred_region
          %p324 = scmp.lt.s32.totalorder %s26, 1
          %s325 = scalar_select %p324, %s26, 1
          %s326 = smul.addr %s325, 4
          %s327 = scalar_lea.vmem %s1, %s326
        $region52: #{tpu_custom_call.1} parent=43 // pred_fallthru
          _
      $region44: #{tpu_custom_call.1} parent=5 // pred_fallthru
        _
      %p328 = scmp.le.s32.totalorder 1, %s19
      %p329 = scmp.lt.s32.totalorder %s19, 5
      %p330 = pnand %p328, %p329
      %p331 = pneg %p330
      // Predicated region
      $region53: #{tpu_custom_call.1} parent=5 // pred_check
        _
      $region54: #{tpu_custom_call.1} parent=5 // pred_check_branch
        %333 = sbr.rel (%p330) target = $region56
      $region55: #{tpu_custom_call.1} parent=5 // pred_region
        %s334 = ssub.s32 %s19, 1
        // Predicated region
        $region57: #{tpu_custom_call.1} parent=55 // pred_check
          %p335 = pneg %p148
        $region58: #{tpu_custom_call.1} parent=55 // pred_check_branch
          %337 = sbr.rel (%p335) target = $region60
        $region59: #{tpu_custom_call.1} parent=55 // pred_region
          %338 = dma.done [#allocation5], 128
        $region60: #{tpu_custom_call.1} parent=55 // pred_fallthru
          _
        %p339 = scmp.lt.s32.totalorder %s28, 1
        %s340 = scalar_select %p339, %s28, 1
        %p341 = scmp.lt.s32.totalorder %s29, 1
        %s342 = scalar_select %p341, %s29, 1
        %s343 = smul.addr %s340, 2
        %s344 = sadd.s32 %s342, %s343
        %s345 = smul.addr %s344, 4
        %s346 = scalar_lea.vmem %s0, %s345
        %p347 = pneg %p59
        %p348 = pneg %p56
        %p349 = scmp.lt.s32.totalorder %s28, 1
        %s350 = scalar_select %p349, %s28, 1
        %s351 = smul.addr %s350, 4
        %s352 = scalar_lea.vmem %s1, %s351
        %p353 = pneg %p85
        %p354 = pneg %p82
        %p355 = pneg %p106
        %p356 = pneg %p103
        %p357 = pneg %p127
        %p358 = pneg %p124
        %p359 = pneg %p148
        %p360 = pneg %p145
        %p361 = pneg %p169
        %p362 = pneg %p166
        %p363 = pneg %p190
        %p364 = pneg %p187
        %p365 = pneg %p211
        %p366 = pneg %p208
        %p367 = pneg %p232
        %p368 = pneg %p229
        %p369 = pneg %p260
        %p370 = pneg %p257
        %s371 = sand.u32 %s247, 1
        %s372 = scalar_lea.sflag [#allocation6], %s371
        %s373 = sand.u32 %s247, 1
        %s374 = smul.addr %s373, 4
        %s375 = scalar_lea.vmem [#allocation7], %s374
        %p376 = scmp.lt.s32.totalorder %s28, 1
        %s377 = scalar_select %p376, %s28, 1
        %p378 = scmp.lt.s32.totalorder %s29, 1
        %s379 = scalar_select %p378, %s29, 1
        %s380 = smul.addr %s377, 2
        %s381 = sadd.s32 %s379, %s380
        %s382 = smul.addr %s381, 4
        %s383 = scalar_lea.vmem %s0, %s382
        %p384 = scmp.lt.s32.totalorder %s28, 1
        %s385 = scalar_select %p384, %s28, 1
        %s386 = smul.addr %s385, 4
        %s387 = scalar_lea.vmem %s1, %s386
        %p389 = scmp.eq.s32.totalorder %s29, 0
        // Predicated region
        $region61: #{tpu_custom_call.1} parent=55 // pred_check
          %p390 = pneg %p389
        $region62: #{tpu_custom_call.1} parent=55 // pred_check_branch
          %392 = sbr.rel (%p390) target = $region64
        $region63: #{tpu_custom_call.1} parent=55 // pred_region
          %v393 = vld [vmem:[%s387] sm:$0xf]
          %v394 = vld [vmem:[%s3] sm:$0xf]
          %v395 = vld [vmem:[%s3 + $0x4] sm:$0xf]
          %v398 = vunpack.c.l.b16 %v394
          %v399 = vunpack.c.l.b16 %v395
          %v400 = vpack.c.b16 %v399, %v398
          %vm402 = vcmask 130048
          %v404 = vsel %vm402, %v393, 0
          %406 = vmatprep.subr.bf16.mxu0 0
          %407 = vmatpush1.bf16.msra.mxu0 %v400
          %408 = vmatprep.subr.bf16.mxu0 0
          %409 = vmatpush1.bf16.msra.mxu0 0
          %410 = vmatprep.subr.bf16.mxu0 0
          %411 = vmatpush1.bf16.msra.mxu0 0
          %412 = vmatprep.subr.bf16.mxu0 0
          %413 = vmatpush1.bf16.msra.mxu0 0
          %414 = vmatprep.subr.bf16.mxu0 0
          %415 = vmatpush1.bf16.msra.mxu0 0
          %416 = vmatprep.subr.bf16.mxu0 0
          %417 = vmatpush1.bf16.msra.mxu0 0
          %418 = vmatprep.subr.bf16.mxu0 0
          %419 = vmatpush1.bf16.msra.mxu0 0
          %420 = vmatprep.subr.bf16.mxu0 0
          %421 = vmatpush1.bf16.msra.mxu0 0
          %422 = vmatprep.subr.bf16.mxu0 0
          %423 = vmatpush1.bf16.msra.mxu0 0
          %424 = vmatprep.subr.bf16.mxu0 0
          %425 = vmatpush1.bf16.msra.mxu0 0
          %426 = vmatprep.subr.bf16.mxu0 0
          %427 = vmatpush1.bf16.msra.mxu0 0
          %428 = vmatprep.subr.bf16.mxu0 0
          %429 = vmatpush1.bf16.msra.mxu0 0
          %430 = vmatprep.subr.bf16.mxu0 0
          %431 = vmatpush1.bf16.msra.mxu0 0
          %432 = vmatprep.subr.bf16.mxu0 0
          %433 = vmatpush1.bf16.msra.mxu0 0
          %434 = vmatprep.subr.bf16.mxu0 0
          %435 = vmatpush1.bf16.msra.mxu0 0
          %436 = vmatprep.subr.bf16.mxu0 0
          %437 = vmatpush1.bf16.msra.mxu0 0
          %438 = vmatprep.mubr.bf16.mxu0 0
          %439 = vmatmul.mubr.bf16.gmra.mrb[0].mxu0 %v404
          %v440 = vpop.f32.mrb[0].mxu0
          %v441 = vadd.f32 0.0, %v440
          %v442 = vpop.f32.mrb[0].mxu0
          %v443 = vpop.f32.mrb[0].mxu0
          %v444 = vpop.f32.mrb[0].mxu0
          %445 = vdwg.mxu0
          %v446 = vld [vmem:[#allocation4] sm:$0xf]
          %v447 = vld [vmem:[#allocation4 + $0x4] sm:$0xf]
          %v450 = vunpack.c.l.b16 %v446
          %v451 = vunpack.c.l.b16 %v447
          %v452 = vpack.c.b16 %v451, %v450
          %454 = vmatprep.subr.bf16.mxu0 0
          %455 = vmatpush1.bf16.msra.mxu0 %v452
          %456 = vmatprep.subr.bf16.mxu0 0
          %457 = vmatpush1.bf16.msra.mxu0 0
          %458 = vmatprep.subr.bf16.mxu0 0
          %459 = vmatpush1.bf16.msra.mxu0 0
          %460 = vmatprep.subr.bf16.mxu0 0
          %461 = vmatpush1.bf16.msra.mxu0 0
          %462 = vmatprep.subr.bf16.mxu0 0
          %463 = vmatpush1.bf16.msra.mxu0 0
          %464 = vmatprep.subr.bf16.mxu0 0
          %465 = vmatpush1.bf16.msra.mxu0 0
          %466 = vmatprep.subr.bf16.mxu0 0
          %467 = vmatpush1.bf16.msra.mxu0 0
          %468 = vmatprep.subr.bf16.mxu0 0
          %469 = vmatpush1.bf16.msra.mxu0 0
          %470 = vmatprep.subr.bf16.mxu0 0
          %471 = vmatpush1.bf16.msra.mxu0 0
          %472 = vmatprep.subr.bf16.mxu0 0
          %473 = vmatpush1.bf16.msra.mxu0 0
          %474 = vmatprep.subr.bf16.mxu0 0
          %475 = vmatpush1.bf16.msra.mxu0 0
          %476 = vmatprep.subr.bf16.mxu0 0
          %477 = vmatpush1.bf16.msra.mxu0 0
          %478 = vmatprep.subr.bf16.mxu0 0
          %479 = vmatpush1.bf16.msra.mxu0 0
          %480 = vmatprep.subr.bf16.mxu0 0
          %481 = vmatpush1.bf16.msra.mxu0 0
          %482 = vmatprep.subr.bf16.mxu0 0
          %483 = vmatpush1.bf16.msra.mxu0 0
          %484 = vmatprep.subr.bf16.mxu0 0
          %485 = vmatpush1.bf16.msra.mxu0 0
          %486 = vmatprep.mubr.bf16.mxu0 0
          %487 = vmatmul.mubr.bf16.gmra.mrb[0].mxu0 %v404
          %v488 = vpop.f32.mrb[0].mxu0
          %v489 = vadd.f32 0.0, %v488
          %v490 = vpop.f32.mrb[0].mxu0
          %v491 = vpop.f32.mrb[0].mxu0
          %v492 = vpop.f32.mrb[0].mxu0
          %493 = vdwg.mxu0
          %v494 = vpack.c.bf16 %v441, %v441
          %vm495 = vcmask 125952
          %496 = vst.msk [vmem:[#allocation2] sm:$0xf] %vm495, %v494
          %v497 = vpack.c.bf16 %v489, %v489
          %498 = vst.msk [vmem:[#allocation3] sm:$0xf] %vm495, %v497
        $region64: #{tpu_custom_call.1} parent=55 // pred_fallthru
          _
        %v499 = vld [vmem:[%s383] sm:$0xf]
        %v500 = vld [vmem:[%s2] sm:$0xf]
        %v501 = vld [vmem:[%s2 + $0x4] sm:$0xf]
        %v502 = vld [vmem:[%s2 + $0x8] sm:$0xf]
        %v503 = vld [vmem:[%s2 + $0xc] sm:$0xf]
        %v508 = vunpack.c.l.b16 %v500
        %v509 = vunpack.c.l.b16 %v501
        %v510 = vunpack.c.l.b16 %v502
        %v511 = vunpack.c.l.b16 %v503
        %v512 = vpack.c.b16 %v509, %v508
        %v513 = vpack.c.b16 %v511, %v510
        %vm516 = vcmask 261120
        %v518 = vsel %vm516, %v499, 0
        %520 = vmatprep.subr.bf16.mxu0 0
        %521 = vmatpush1.bf16.msra.mxu0 %v512
        %522 = vmatprep.subr.bf16.mxu0 0
        %523 = vmatpush1.bf16.msra.mxu0 %v513
        %524 = vmatprep.subr.bf16.mxu0 0
        %525 = vmatpush1.bf16.msra.mxu0 0
        %526 = vmatprep.subr.bf16.mxu0 0
        %527 = vmatpush1.bf16.msra.mxu0 0
        %528 = vmatprep.subr.bf16.mxu0 0
        %529 = vmatpush1.bf16.msra.mxu0 0
        %530 = vmatprep.subr.bf16.mxu0 0
        %531 = vmatpush1.bf16.msra.mxu0 0
        %532 = vmatprep.subr.bf16.mxu0 0
        %533 = vmatpush1.bf16.msra.mxu0 0
        %534 = vmatprep.subr.bf16.mxu0 0
        %535 = vmatpush1.bf16.msra.mxu0 0
        %536 = vmatprep.subr.bf16.mxu0 0
        %537 = vmatpush1.bf16.msra.mxu0 0
        %538 = vmatprep.subr.bf16.mxu0 0
        %539 = vmatpush1.bf16.msra.mxu0 0
        %540 = vmatprep.subr.bf16.mxu0 0
        %541 = vmatpush1.bf16.msra.mxu0 0
        %542 = vmatprep.subr.bf16.mxu0 0
        %543 = vmatpush1.bf16.msra.mxu0 0
        %544 = vmatprep.subr.bf16.mxu0 0
        %545 = vmatpush1.bf16.msra.mxu0 0
        %546 = vmatprep.subr.bf16.mxu0 0
        %547 = vmatpush1.bf16.msra.mxu0 0
        %548 = vmatprep.subr.bf16.mxu0 0
        %549 = vmatpush1.bf16.msra.mxu0 0
        %550 = vmatprep.subr.bf16.mxu0 0
        %551 = vmatpush1.bf16.msra.mxu0 0
        %552 = vmatprep.mubr.bf16.mxu0 0
        %553 = vmatmul.mubr.bf16.gmra.mrb[0].mxu0 %v518
        %v554 = vpop.f32.mrb[0].mxu0
        %v555 = vadd.f32 0.0, %v554
        %v556 = vpop.f32.mrb[0].mxu0
        %v557 = vpop.f32.mrb[0].mxu0
        %v558 = vpop.f32.mrb[0].mxu0
        %559 = vdwg.mxu0
        %v560 = vmul.f32 %v555, 0.35355338
        %v561 = vpack.c.bf16 %v560, %v560
        %v562 = vld [vmem:[#allocation2] sm:$0xf]
        %v563 = vld [vmem:[#allocation3] sm:$0xf]
        %vm564 = vcmask 64512
        %v566 = vsel %vm564, %v561, 0
        %v569 = vsel %vm564, %v562, 0
        %571 = vmatprep.subr.bf16.mxu0 0
        %572 = vmatpush1.bf16.xpose.msra.mxu0 %v569
        %573 = vmatprep.subr.bf16.mxu0 0
        %574 = vmatpush1.bf16.xpose.msra.mxu0 0
        %575 = vmatprep.subr.bf16.mxu0 0
        %576 = vmatpush1.bf16.xpose.msra.mxu0 0
        %577 = vmatprep.subr.bf16.mxu0 0
        %578 = vmatpush1.bf16.xpose.msra.mxu0 0
        %579 = vmatprep.subr.bf16.mxu0 0
        %580 = vmatpush1.bf16.xpose.msra.mxu0 0
        %581 = vmatprep.subr.bf16.mxu0 0
        %582 = vmatpush1.bf16.xpose.msra.mxu0 0
        %583 = vmatprep.subr.bf16.mxu0 0
        %584 = vmatpush1.bf16.xpose.msra.mxu0 0
        %585 = vmatprep.subr.bf16.mxu0 0
        %586 = vmatpush1.bf16.xpose.msra.mxu0 0
        %587 = vmatprep.subr.bf16.mxu0 0
        %588 = vmatpush1.bf16.xpose.msra.mxu0 0
        %589 = vmatprep.subr.bf16.mxu0 0
        %590 = vmatpush1.bf16.xpose.msra.mxu0 0
        %591 = vmatprep.subr.bf16.mxu0 0
        %592 = vmatpush1.bf16.xpose.msra.mxu0 0
        %593 = vmatprep.subr.bf16.mxu0 0
        %594 = vmatpush1.bf16.xpose.msra.mxu0 0
        %595 = vmatprep.subr.bf16.mxu0 0
        %596 = vmatpush1.bf16.xpose.msra.mxu0 0
        %597 = vmatprep.subr.bf16.mxu0 0
        %598 = vmatpush1.bf16.xpose.msra.mxu0 0
        %599 = vmatprep.subr.bf16.mxu0 0
        %600 = vmatpush1.bf16.xpose.msra.mxu0 0
        %601 = vmatprep.subr.bf16.mxu0 0
        %602 = vmatpush1.bf16.xpose.msra.mxu0 0
        %603 = vmatprep.mubr.bf16.mxu0 0
        %604 = vmatmul.mubr.bf16.gmra.mrb[0].mxu0 %v566
        %v605 = vpop.f32.mrb[0].mxu0
        %v606 = vadd.f32 0.0, %v605
        %v607 = vpop.f32.mrb[0].mxu0
        %v608 = vpop.f32.mrb[0].mxu0
        %v609 = vpop.f32.mrb[0].mxu0
        %610 = vdwg.mxu0
        %v611 = vsel %vm564, %v606, -inf
        %612 = vmax.xlane.f32.xlu0 %v611
        %v613 = vpop.xlane.xlu0 %612
        %v614 = vsub.f32 %v606, %v613
        %v615 = vmul.f32 %v614, 1.442695
        %v616 = vpow.pop %v615
        %v617 = vsel %vm564, %v616, 0.0
        %618 = vadd.xlane.f32.xlu0 %v617
        %v619 = vpop.xlane.xlu0 %618
        %v620 = vrcp.pop %v619
        %v621 = vmul.f32 %v616, %v620
        %v622 = vpack.c.bf16 %v621, %v621
        %v624 = vsel %vm564, %v622, 0
        %vm626 = vcmask 1043456
        %v628 = vsel %vm626, %v563, 0
        %630 = vmatprep.subr.bf16.mxu0 0
        %631 = vmatpush1.bf16.msra.mxu0 %v628
        %632 = vmatprep.subr.bf16.mxu0 0
        %633 = vmatpush1.bf16.msra.mxu0 0
        %634 = vmatprep.subr.bf16.mxu0 0
        %635 = vmatpush1.bf16.msra.mxu0 0
        %636 = vmatprep.subr.bf16.mxu0 0
        %637 = vmatpush1.bf16.msra.mxu0 0
        %638 = vmatprep.subr.bf16.mxu0 0
        %639 = vmatpush1.bf16.msra.mxu0 0
        %640 = vmatprep.subr.bf16.mxu0 0
        %641 = vmatpush1.bf16.msra.mxu0 0
        %642 = vmatprep.subr.bf16.mxu0 0
        %643 = vmatpush1.bf16.msra.mxu0 0
        %644 = vmatprep.subr.bf16.mxu0 0
        %645 = vmatpush1.bf16.msra.mxu0 0
        %646 = vmatprep.subr.bf16.mxu0 0
        %647 = vmatpush1.bf16.msra.mxu0 0
        %648 = vmatprep.subr.bf16.mxu0 0
        %649 = vmatpush1.bf16.msra.mxu0 0
        %650 = vmatprep.subr.bf16.mxu0 0
        %651 = vmatpush1.bf16.msra.mxu0 0
        %652 = vmatprep.subr.bf16.mxu0 0
        %653 = vmatpush1.bf16.msra.mxu0 0
        %654 = vmatprep.subr.bf16.mxu0 0
        %655 = vmatpush1.bf16.msra.mxu0 0
        %656 = vmatprep.subr.bf16.mxu0 0
        %657 = vmatpush1.bf16.msra.mxu0 0
        %658 = vmatprep.subr.bf16.mxu0 0
        %659 = vmatpush1.bf16.msra.mxu0 0
        %660 = vmatprep.subr.bf16.mxu0 0
        %661 = vmatpush1.bf16.msra.mxu0 0
        %662 = vmatprep.mubr.bf16.mxu0 0
        %663 = vmatmul.mubr.bf16.gmra.mrb[0].mxu0 %v624
        %v664 = vpop.f32.mrb[0].mxu0
        %v665 = vadd.f32 0.0, %v664
        %v666 = vpop.f32.mrb[0].mxu0
        %v667 = vpop.f32.mrb[0].mxu0
        %v668 = vpop.f32.mrb[0].mxu0
        %669 = vdwg.mxu0
        %v670 = vpack.c.bf16 %v665, %v665
        %v671 = vld [vmem:[%s5] sm:$0xf]
        %673 = vrot.lane.b32.xlu0 %v561, 120
        %v674 = vpop.permute.xlu0 %673
        %v676 = vunpack.c.l.b16 %v562
        %v677 = vpack.c.b16 %v676, %v676
        %678 = vrot.lane.b32.xlu0 %v677, 120
        %v679 = vpop.permute.xlu0 %678
        %v681 = vsel %vm564, %v674, 0
        %v684 = vsel %vm564, %v679, 0
        %686 = vmatprep.subr.bf16.mxu0 0
        %687 = vmatpush1.bf16.xpose.msra.mxu0 %v684
        %688 = vmatprep.subr.bf16.mxu0 0
        %689 = vmatpush1.bf16.xpose.msra.mxu0 0
        %690 = vmatprep.subr.bf16.mxu0 0
        %691 = vmatpush1.bf16.xpose.msra.mxu0 0
        %692 = vmatprep.subr.bf16.mxu0 0
        %693 = vmatpush1.bf16.xpose.msra.mxu0 0
        %694 = vmatprep.subr.bf16.mxu0 0
        %695 = vmatpush1.bf16.xpose.msra.mxu0 0
        %696 = vmatprep.subr.bf16.mxu0 0
        %697 = vmatpush1.bf16.xpose.msra.mxu0 0
        %698 = vmatprep.subr.bf16.mxu0 0
        %699 = vmatpush1.bf16.xpose.msra.mxu0 0
        %700 = vmatprep.subr.bf16.mxu0 0
        %701 = vmatpush1.bf16.xpose.msra.mxu0 0
        %702 = vmatprep.subr.bf16.mxu0 0
        %703 = vmatpush1.bf16.xpose.msra.mxu0 0
        %704 = vmatprep.subr.bf16.mxu0 0
        %705 = vmatpush1.bf16.xpose.msra.mxu0 0
        %706 = vmatprep.subr.bf16.mxu0 0
        %707 = vmatpush1.bf16.xpose.msra.mxu0 0
        %708 = vmatprep.subr.bf16.mxu0 0
        %709 = vmatpush1.bf16.xpose.msra.mxu0 0
        %710 = vmatprep.subr.bf16.mxu0 0
        %711 = vmatpush1.bf16.xpose.msra.mxu0 0
        %712 = vmatprep.subr.bf16.mxu0 0
        %713 = vmatpush1.bf16.xpose.msra.mxu0 0
        %714 = vmatprep.subr.bf16.mxu0 0
        %715 = vmatpush1.bf16.xpose.msra.mxu0 0
        %716 = vmatprep.subr.bf16.mxu0 0
        %717 = vmatpush1.bf16.xpose.msra.mxu0 0
        %718 = vmatprep.mubr.bf16.mxu0 0
        %719 = vmatmul.mubr.bf16.gmra.mrb[0].mxu0 %v681
        %v720 = vpop.f32.mrb[0].mxu0
        %v721 = vadd.f32 0.0, %v720
        %v722 = vpop.f32.mrb[0].mxu0
        %v723 = vpop.f32.mrb[0].mxu0
        %v724 = vpop.f32.mrb[0].mxu0
        %725 = vdwg.mxu0
        %v726 = vsel %vm564, %v721, -inf
        %727 = vmax.xlane.f32.xlu0 %v726
        %v728 = vpop.xlane.xlu0 %727
        %v729 = vsub.f32 %v721, %v728
        %v730 = vmul.f32 %v729, 1.442695
        %v731 = vpow.pop %v730
        %v732 = vsel %vm564, %v731, 0.0
        %733 = vadd.xlane.f32.xlu0 %v732
        %v734 = vpop.xlane.xlu0 %733
        %v735 = vrcp.pop %v734
        %v736 = vmul.f32 %v731, %v735
        %v737 = vpack.c.bf16 %v736, %v736
        %v739 = vunpack.c.l.b16 %v563
        %v740 = vpack.c.b16 %v739, %v739
        %741 = vrot.lane.b32.xlu0 %v740, 120
        %v742 = vpop.permute.xlu0 %741
        %v744 = vsel %vm564, %v737, 0
        %v747 = vsel %vm626, %v742, 0
        %749 = vmatprep.subr.bf16.mxu0 0
        %750 = vmatpush1.bf16.msra.mxu0 %v747
        %751 = vmatprep.subr.bf16.mxu0 0
        %752 = vmatpush1.bf16.msra.mxu0 0
        %753 = vmatprep.subr.bf16.mxu0 0
        %754 = vmatpush1.bf16.msra.mxu0 0
        %755 = vmatprep.subr.bf16.mxu0 0
        %756 = vmatpush1.bf16.msra.mxu0 0
        %757 = vmatprep.subr.bf16.mxu0 0
        %758 = vmatpush1.bf16.msra.mxu0 0
        %759 = vmatprep.subr.bf16.mxu0 0
        %760 = vmatpush1.bf16.msra.mxu0 0
        %761 = vmatprep.subr.bf16.mxu0 0
        %762 = vmatpush1.bf16.msra.mxu0 0
        %763 = vmatprep.subr.bf16.mxu0 0
        %764 = vmatpush1.bf16.msra.mxu0 0
        %765 = vmatprep.subr.bf16.mxu0 0
        %766 = vmatpush1.bf16.msra.mxu0 0
        %767 = vmatprep.subr.bf16.mxu0 0
        %768 = vmatpush1.bf16.msra.mxu0 0
        %769 = vmatprep.subr.bf16.mxu0 0
        %770 = vmatpush1.bf16.msra.mxu0 0
        %771 = vmatprep.subr.bf16.mxu0 0
        %772 = vmatpush1.bf16.msra.mxu0 0
        %773 = vmatprep.subr.bf16.mxu0 0
        %774 = vmatpush1.bf16.msra.mxu0 0
        %775 = vmatprep.subr.bf16.mxu0 0
        %776 = vmatpush1.bf16.msra.mxu0 0
        %777 = vmatprep.subr.bf16.mxu0 0
        %778 = vmatpush1.bf16.msra.mxu0 0
        %779 = vmatprep.subr.bf16.mxu0 0
        %780 = vmatpush1.bf16.msra.mxu0 0
        %781 = vmatprep.mubr.bf16.mxu0 0
        %782 = vmatmul.mubr.bf16.gmra.mrb[0].mxu0 %v744
        %v783 = vpop.f32.mrb[0].mxu0
        %v784 = vadd.f32 0.0, %v783
        %v785 = vpop.f32.mrb[0].mxu0
        %v786 = vpop.f32.mrb[0].mxu0
        %v787 = vpop.f32.mrb[0].mxu0
        %788 = vdwg.mxu0
        %v789 = vpack.c.bf16 %v784, %v784
        %v790 = vld [vmem:[%s5 + $0x4] sm:$0xf]
        %v792 = vsel %vm564, %v789, 0
        %v795 = vsel %vm626, %v790, 0
        %797 = vmatprep.subr.bf16.mxu0 0
        %798 = vmatpush1.bf16.msra.mxu0 %v795
        %799 = vmatprep.subr.bf16.mxu0 0
        %800 = vmatpush1.bf16.msra.mxu0 0
        %801 = vmatprep.subr.bf16.mxu0 0
        %802 = vmatpush1.bf16.msra.mxu0 0
        %803 = vmatprep.subr.bf16.mxu0 0
        %804 = vmatpush1.bf16.msra.mxu0 0
        %805 = vmatprep.subr.bf16.mxu0 0
        %806 = vmatpush1.bf16.msra.mxu0 0
        %807 = vmatprep.subr.bf16.mxu0 0
        %808 = vmatpush1.bf16.msra.mxu0 0
        %809 = vmatprep.subr.bf16.mxu0 0
        %810 = vmatpush1.bf16.msra.mxu0 0
        %811 = vmatprep.subr.bf16.mxu0 0
        %812 = vmatpush1.bf16.msra.mxu0 0
        %813 = vmatprep.subr.bf16.mxu0 0
        %814 = vmatpush1.bf16.msra.mxu0 0
        %815 = vmatprep.subr.bf16.mxu0 0
        %816 = vmatpush1.bf16.msra.mxu0 0
        %817 = vmatprep.subr.bf16.mxu0 0
        %818 = vmatpush1.bf16.msra.mxu0 0
        %819 = vmatprep.subr.bf16.mxu0 0
        %820 = vmatpush1.bf16.msra.mxu0 0
        %821 = vmatprep.subr.bf16.mxu0 0
        %822 = vmatpush1.bf16.msra.mxu0 0
        %823 = vmatprep.subr.bf16.mxu0 0
        %824 = vmatpush1.bf16.msra.mxu0 0
        %825 = vmatprep.subr.bf16.mxu0 0
        %826 = vmatpush1.bf16.msra.mxu0 0
        %827 = vmatprep.subr.bf16.mxu0 0
        %828 = vmatpush1.bf16.msra.mxu0 0
        %829 = vmatprep.mubr.bf16.mxu0 0
        %830 = vmatmul.mubr.bf16.gmra.mrb[0].mxu0 %v792
        %v831 = vpop.f32.mrb[0].mxu0
        %v832 = vadd.f32 0.0, %v831
        %v833 = vpop.f32.mrb[0].mxu0
        %v834 = vpop.f32.mrb[0].mxu0
        %v835 = vpop.f32.mrb[0].mxu0
        %836 = vdwg.mxu0
        %v838 = vsel %vm564, %v670, 0
        %v841 = vsel %vm626, %v671, 0
        %843 = vmatprep.subr.bf16.mxu0 0
        %844 = vmatpush1.bf16.msra.mxu0 %v841
        %845 = vmatprep.subr.bf16.mxu0 0
        %846 = vmatpush1.bf16.msra.mxu0 0
        %847 = vmatprep.subr.bf16.mxu0 0
        %848 = vmatpush1.bf16.msra.mxu0 0
        %849 = vmatprep.subr.bf16.mxu0 0
        %850 = vmatpush1.bf16.msra.mxu0 0
        %851 = vmatprep.subr.bf16.mxu0 0
        %852 = vmatpush1.bf16.msra.mxu0 0
        %853 = vmatprep.subr.bf16.mxu0 0
        %854 = vmatpush1.bf16.msra.mxu0 0
        %855 = vmatprep.subr.bf16.mxu0 0
        %856 = vmatpush1.bf16.msra.mxu0 0
        %857 = vmatprep.subr.bf16.mxu0 0
        %858 = vmatpush1.bf16.msra.mxu0 0
        %859 = vmatprep.subr.bf16.mxu0 0
        %860 = vmatpush1.bf16.msra.mxu0 0
        %861 = vmatprep.subr.bf16.mxu0 0
        %862 = vmatpush1.bf16.msra.mxu0 0
        %863 = vmatprep.subr.bf16.mxu0 0
        %864 = vmatpush1.bf16.msra.mxu0 0
        %865 = vmatprep.subr.bf16.mxu0 0
        %866 = vmatpush1.bf16.msra.mxu0 0
        %867 = vmatprep.subr.bf16.mxu0 0
        %868 = vmatpush1.bf16.msra.mxu0 0
        %869 = vmatprep.subr.bf16.mxu0 0
        %870 = vmatpush1.bf16.msra.mxu0 0
        %871 = vmatprep.subr.bf16.mxu0 0
        %872 = vmatpush1.bf16.msra.mxu0 0
        %873 = vmatprep.subr.bf16.mxu0 0
        %874 = vmatpush1.bf16.msra.mxu0 0
        %875 = vmatprep.mubr.bf16.mxu0 0
        %876 = vmatmul.mubr.bf16.gmra.mrb[0].mxu0 %v838
        %v877 = vpop.f32.mrb[0].mxu0
        %v878 = vadd.f32 %v832, %v877
        %v879 = vpop.f32.mrb[0].mxu0
        %v880 = vpop.f32.mrb[0].mxu0
        %v881 = vpop.f32.mrb[0].mxu0
        %882 = vdwg.mxu0
        %v883 = vld [vmem:[%s6] sm:$0x1]
        %v885 = vlaneseq
        %v886 = vshrl.u32 %v885, 7
        %v887 = vsub.s32 0, %v886
        %v888 = vrot.slane %v883, %v887
        %v890 = vadd.f32 %v878, %v888
        %vm891 = vcmask 130048
        %v892 = vsel %vm891, %v890, 0.0
        %893 = vadd.xlane.f32.xlu0 %v892
        %v894 = vpop.xlane.xlu0 %893
        %v895 = vrcp.pop 16.0
        %v896 = vmul.f32 %v894, %v895
        %v897 = vsub.f32 %v890, %v896
        %v898 = vmul.f32 %v897, %v897
        %v899 = vsel %vm891, %v898, 0.0
        %900 = vadd.xlane.f32.xlu0 %v899
        %v901 = vpop.xlane.xlu0 %900
        %v902 = vmul.f32 %v901, %v895
        %v903 = vadd.f32 %v902, 1e-05
        %v904 = vrsqrt.pop %v903
        %v905 = vmul.f32 %v897, %v904
        %v906 = vld [vmem:[%s7] sm:$0x1]
        %v908 = vlaneseq
        %v909 = vshrl.u32 %v908, 7
        %v910 = vsub.s32 0, %v909
        %v911 = vrot.slane %v906, %v910
        %v913 = vmul.f32 %v905, %v911
        %v914 = vld [vmem:[%s8] sm:$0x1]
        %v916 = vlaneseq
        %v917 = vshrl.u32 %v916, 7
        %v918 = vsub.s32 0, %v917
        %v919 = vrot.slane %v914, %v918
        %v921 = vadd.f32 %v913, %v919
        %v922 = vmax.f32 %v921, 0.0
        %v923 = vpack.c.bf16 %v922, %v922
        %vm924 = vcmask 125952
        %925 = vst.msk [vmem:[%s375] sm:$0xf] %vm924, %v923
        %s926 = sand.u32 %s247, 1
        %s927 = scalar_lea.sflag [#allocation6], %s926
        %s928 = sand.u32 %s247, 1
        %s929 = smul.addr %s928, 4
        %s930 = scalar_lea.vmem [#allocation7], %s929
        // Predicated region
        $region65: #{tpu_custom_call.1} parent=55 // pred_check
          %p931 = pneg %p257
        $region66: #{tpu_custom_call.1} parent=55 // pred_check_branch
          %933 = sbr.rel (%p931) target = $region68
        $region67: #{tpu_custom_call.1} parent=55 // pred_region
          %s935 = ssub.s32 64, 64
          %936 = vsyncadd %s927, %s935
          %s937 = smul.addr %s28, 2
          %s938 = sadd.s32 %s29, %s937
          %s939 = smul.addr %s938, 64
          %s940 = scalar_lea.hbm %s9, %s939
          %s942 = sshll.u32 %s930, 4
          %s943 = int_to_ptr.vmem [resolvable:$true] %s942
          %945 = dma.vmem_to_hbm [thread:$0]  %s943, 64, %s940, %s927
        $region68: #{tpu_custom_call.1} parent=55 // pred_fallthru
          _
      $region56: #{tpu_custom_call.1} parent=5 // pred_fallthru
        _
      %p946 = scmp.le.s32.totalorder 2, %s19
      // Predicated region
      $region69: #{tpu_custom_call.1} parent=5 // pred_check
        %p947 = pneg %p946
      $region70: #{tpu_custom_call.1} parent=5 // pred_check_branch
        %949 = sbr.rel (%p947) target = $region72
      $region71: #{tpu_custom_call.1} parent=5 // pred_region
        %s950 = ssub.s32 %s19, 2
        // Predicated region
        $region73: #{tpu_custom_call.1} parent=71 // pred_check
          %p951 = pneg %p263
        $region74: #{tpu_custom_call.1} parent=71 // pred_check_branch
          %953 = sbr.rel (%p951) target = $region76
        $region75: #{tpu_custom_call.1} parent=71 // pred_region
          %s954 = sand.u32 %s248, 1
          %s955 = scalar_lea.sflag [#allocation6], %s954
          %s956 = sand.u32 %s248, 1
          %s957 = smul.addr %s956, 4
          %s958 = scalar_lea.vmem [#allocation7], %s957
          %959 = dma.done %s955, 64
        $region76: #{tpu_custom_call.1} parent=71 // pred_fallthru
          _
      $region72: #{tpu_custom_call.1} parent=5 // pred_fallthru
        _
    $region6: #{tpu_custom_call.1} parent=1 // loop_footer
      %s23 = sadd.s32 1, %s19
    $region7: #{tpu_custom_call.1} parent=1 // loop_footer_branch
      %18 = sbr.rel target = $region3
    $region8: #{tpu_custom_call.1} parent=1 // loop_exit
      _
    %960 = vsyncpa [#allocation5], 1
    %s961 = scalar_lea.sflag [#allocation5], 1
    %962 = vsyncpa %s961, 1
    %963 = vsyncpa [#allocation6], 1
    %s964 = scalar_lea.sflag [#allocation6], 1
    %965 = vsyncpa %s964, 1

</llo_original>
